<compile_context>
chip_gen: v6e
topology: v6e:2x2x1
jax: 0.10.0
libtpu: 0.0.40
codegen_flags: <defaults>
</compile_context>

<pallas_src>
import functools
import math

import jax
import jax.numpy as jnp
from jax.experimental import pallas as pl
from jax.experimental.pallas import tpu as pltpu


def _round_up(x, m):
    return ((x + m - 1) // m) * m


def _choose_tile(n, candidates, *, min_steps=1):
    """Largest tile from `candidates` that does not exceed the padded extent and
    leaves at least `min_steps` grid steps; falls back to the smallest candidate.
    The axis is then zero-padded to a tile multiple, so there is never an
    unbounded (untiled) DMA."""
    cands = sorted(set(candidates), reverse=True)
    base = cands[-1]
    npad = _round_up(n, base)
    for c in cands:
        if c <= npad and -(-npad // c) >= min_steps:
            return c
    return base


def _vmem_limit(budget_bytes):
    # Raise the scoped-VMEM limit explicitly (v5e default is only 16 MiB) while
    # staying under v7x's 64 MiB physical VMEM.
    return int(min(64 * 2**20, max(32 * 2**20, 2 * budget_bytes)))


# ----------------------------------------------------------------------------
# Kernel A (used twice): tiled  out[M,N] = x[M,K] @ w[K,N] + b[1,N]
#   bf16 operands, f32 VMEM accumulator, f32 bias add, pl.when init/finalize.
# ----------------------------------------------------------------------------
def _matmul_bias_kernel(x_ref, w_ref, b_ref, o_ref, acc_ref):
    k = pl.program_id(2)

    @pl.when(k == 0)
    def _():
        acc_ref[...] = jnp.zeros_like(acc_ref)

    acc_ref[...] += jnp.dot(x_ref[...], w_ref[...],
                            preferred_element_type=jnp.float32)

    @pl.when(k == pl.num_programs(2) - 1)
    def _():
        o_ref[...] = (acc_ref[...] + b_ref[...]).astype(o_ref.dtype)


def _matmul_bias(x, w, b, *, out_dtype, min_row_steps=2):
    """Returns the tile-padded product [Mp, Np]; caller slices what it needs."""
    M, K = x.shape
    Kw, N = w.shape
    assert K == Kw and b.shape == (1, N)

    # Row axis capped so there are >=2 steps (v7x has 2 TensorCores; "parallel"
    # sharding needs at least one row tile per core).
    tm = _choose_tile(M, (512, 256, 128, 64, 32, 16, 8), min_steps=min_row_steps)
    tk = _choose_tile(K, (1536, 1024, 768, 512, 384, 256, 128))
    tn = _choose_tile(N, (1536, 1024, 768, 512, 384, 256, 128))
    Mp, Kp, Np = _round_up(M, tm), _round_up(K, tk), _round_up(N, tn)

    xb = jnp.pad(x, ((0, Mp - M), (0, Kp - K)))
    wb = jnp.pad(w, ((0, Kp - K), (0, Np - N)))
    bb = jnp.pad(b, ((0, 0), (0, Np - N))).astype(jnp.float32)

    in_bytes = xb.dtype.itemsize
    out_bytes = jnp.dtype(out_dtype).itemsize
    budget = (2 * ((tm * tk + tk * tn) * in_bytes + tn * 4 + tm * tn * out_bytes)
              + tm * tn * 4)

    return pl.pallas_call(
        _matmul_bias_kernel,
        out_shape=jax.ShapeDtypeStruct((Mp, Np), out_dtype),
        grid=(Mp // tm, Np // tn, Kp // tk),
        in_specs=[
            pl.BlockSpec((tm, tk), lambda i, j, k: (i, k)),
            pl.BlockSpec((tk, tn), lambda i, j, k: (k, j)),
            pl.BlockSpec((1, tn), lambda i, j, k: (0, j)),
        ],
        out_specs=pl.BlockSpec((tm, tn), lambda i, j, k: (i, j)),
        scratch_shapes=[pltpu.VMEM((tm, tn), jnp.float32)],
        compiler_params=pltpu.CompilerParams(
            dimension_semantics=("parallel", "parallel", "arbitrary"),
            vmem_limit_bytes=_vmem_limit(budget)),
    )(xb, wb, bb)


# ----------------------------------------------------------------------------
# Kernel B: batched attention over frames + frame-mean pool + fused out_proj.fc
#   qkv  : [TB, F, 3*H*dhp]  bf16, per-head column groups are 128-lane aligned,
#          1/sqrt(dh) already folded into the q columns.
#   w_of : [H*dhp, Cp] bf16   (= W_out^T @ W_fc^T, head rows padded to dhp)
#   b_of : [1, Cp]     f32    (= b_out @ W_fc^T + b_fc)
#   out  : [TB, Cp]    f32    (full lane/sublane-dense tile store per step)
# ----------------------------------------------------------------------------
def _attn_pool_fc_kernel(qkv_ref, w_of_ref, b_of_ref, out_ref, *,
                         F, num_heads, dhp):
    inv_f = 1.0 / float(F)
    H = num_heads
    tb, cp = out_ref.shape

    qkv = qkv_ref[...]                                            # [TB, F, 3*H*dhp]
    logits = jnp.zeros((tb, cp), jnp.float32)

    # Short static unroll over heads; every slice below is 128-lane aligned.
    for h in range(H):
        qh = qkv[:, :, h * dhp:(h + 1) * dhp]                     # [TB, F, dhp]
        kh = qkv[:, :, (H + h) * dhp:(H + h + 1) * dhp]
        vh = qkv[:, :, (2 * H + h) * dhp:(2 * H + h + 1) * dhp]

        # scores (1/sqrt(dh) folded into q host-side), f32 accumulation
        s = jnp.einsum('bqd,bkd->bqk', qh, kh,
                       preferred_element_type=jnp.float32)        # [TB, F, F]
        s = s - jnp.max(s, axis=-1, keepdims=True)
        p = jnp.exp(s)
        # divide -> EUP reciprocal slot (VALU stays free)
        p = p * pl.reciprocal(jnp.sum(p, axis=-1, keepdims=True), approx=True)

        # frame-mean folded BEFORE PV: mean_q(P) @ V  (exact, F x less work)
        a = (jnp.sum(p, axis=1, keepdims=True) * inv_f).astype(qkv.dtype)  # [TB,1,F]
        pooled = jnp.einsum('bqk,bkd->bqd', a, vh,
                            preferred_element_type=jnp.float32)[:, 0, :]   # [TB,dhp]

        # out_proj and fc are fused host-side into w_of / b_of
        w_of_h = w_of_ref[h * dhp:(h + 1) * dhp, :]
        logits += jnp.dot(pooled.astype(w_of_h.dtype), w_of_h,
                          preferred_element_type=jnp.float32)              # [TB,Cp]

    out_ref[...] = logits + b_of_ref[...]


# ----------------------------------------------------------------------------
# Wrapper
# ----------------------------------------------------------------------------
def video_clip_classifier(frames, params, *, num_heads=4):
    B, F, C, H, W = frames.shape
    K = C * H * W
    M = B * F
    D = params["w_enc"].shape[1]
    num_classes = params["w_fc"].shape[0]
    assert D % num_heads == 0
    dh = D // num_heads

    Dp = _round_up(D, 128)           # lane-dense feature dim
    dhp = _round_up(dh, 128)         # lane-aligned per-head dim
    HW = num_heads * dhp
    Cp = _round_up(num_classes, 128)

    f32, bf16 = jnp.float32, jnp.bfloat16
    scale = 1.0 / math.sqrt(dh)

    # ---------------- host-side one-time weight layout plumbing ----------------
    w_enc = params["w_enc"].astype(bf16)                                   # [K, D]
    b_enc = params["b_enc"].astype(f32)                                    # [1, D]

    # in-projection re-laid-out per head ([q heads | k heads | v heads], each head
    # padded to dhp=128 lanes); 1/sqrt(dh) folded into the q weights & bias.
    w_in, b_in = params["w_in"].astype(f32), params["b_in"].astype(f32)
    w_q, w_k, w_v = w_in[:D] * scale, w_in[D:2 * D], w_in[2 * D:]
    b_q, b_k, b_v = b_in[:, :D] * scale, b_in[:, D:2 * D], b_in[:, 2 * D:]

    def head_cols_w(wg):   # [D_out, D_in] -> [Dp, H*dhp]
        blocks = [jnp.pad(wg[h * dh:(h + 1) * dh, :].T,
                          ((0, Dp - D), (0, dhp - dh))) for h in range(num_heads)]
        return jnp.concatenate(blocks, axis=1)

    def head_cols_b(bg):   # [1, D] -> [1, H*dhp]
        blocks = [jnp.pad(bg[:, h * dh:(h + 1) * dh], ((0, 0), (0, dhp - dh)))
                  for h in range(num_heads)]
        return jnp.concatenate(blocks, axis=1)

    w_qkv = jnp.concatenate([head_cols_w(w_q), head_cols_w(w_k), head_cols_w(w_v)],
                            axis=1).astype(bf16)                           # [Dp, 3*HW]
    b_qkv = jnp.concatenate([head_cols_b(b_q), head_cols_b(b_k), head_cols_b(b_v)],
                            axis=1)                                        # [1, 3*HW] f32

    # Fuse out_proj and fc (mean over frames commutes with both linear maps):
    #   logits = mean_f(attn) @ (W_out^T @ W_fc^T) + (b_out @ W_fc^T + b_fc)
    w_of = params["w_out"].T.astype(f32) @ params["w_fc"].T.astype(f32)    # [D, C]
    b_of = params["b_out"].astype(f32) @ params["w_fc"].T.astype(f32) \
        + params["b_fc"].astype(f32)                                       # [1, C]
    w_of = jnp.concatenate(
        [jnp.pad(w_of[h * dh:(h + 1) * dh, :],
                 ((0, dhp - dh), (0, Cp - num_classes)))
         for h in range(num_heads)], axis=0).astype(bf16)                  # [HW, Cp]
    b_of = jnp.pad(b_of, ((0, 0), (0, Cp - num_classes)))                  # [1, Cp] f32

    # ---------------- kernel 1: frame encoder (big tiled bf16 matmul) ----------
    x_flat = frames.reshape(M, K).astype(bf16)
    feats = _matmul_bias(x_flat, w_enc, b_enc, out_dtype=bf16)             # [Mp, >=Dp]
    feats = feats[:, :Dp]   # padded cols of w_enc/b_enc are zero -> exactly zero

    # ---------------- kernel 1b: qkv in-projection hoisted out of kernel 2 -----
    qkv = _matmul_bias(feats, w_qkv, b_qkv, out_dtype=bf16)                # [Mp2, >=3*HW]
    qkv = qkv[:M, :3 * HW].reshape(B, F, 3 * HW)

    # ---------------- kernel 2: attention + mean pool + fused out_proj.fc ------
    TB = _choose_tile(B, (64, 32, 16, 8), min_steps=2)   # >=8 rows per output tile
    Bp = _round_up(B, TB)
    qkv = jnp.pad(qkv, ((0, Bp - B), (0, 0), (0, 0)))

    budget = 2 * (TB * F * 3 * HW * 2 + HW * Cp * 2 + Cp * 4 + TB * Cp * 4)
    kernel = functools.partial(_attn_pool_fc_kernel,
                               F=F, num_heads=num_heads, dhp=dhp)
    logits = pl.pallas_call(
        kernel,
        out_shape=jax.ShapeDtypeStruct((Bp, Cp), f32),
        grid=(Bp // TB,),
        in_specs=[
            pl.BlockSpec((TB, F, 3 * HW), lambda i: (i, 0, 0)),
            # weights: constant index map -> stay VMEM-resident across the grid
            pl.BlockSpec((HW, Cp), lambda i: (0, 0)),
            pl.BlockSpec((1, Cp), lambda i: (0, 0)),
        ],
        out_specs=pl.BlockSpec((TB, Cp), lambda i: (i, 0)),
        compiler_params=pltpu.CompilerParams(
            dimension_semantics=("parallel",),   # per-chunk output -> 2 TCs on v7x
            vmem_limit_bytes=_vmem_limit(budget)),
    )(qkv, w_of, b_of)

    return logits[:B, :num_classes]


# ----------------------------------------------------------------------------
# Pure-JAX reference (unpadded f32, matches the PyTorch forward)
# ----------------------------------------------------------------------------
def reference(frames, params, *, num_heads=4):
    B, F, C, H, W = frames.shape
    D = params["w_enc"].shape[1]
    dh = D // num_heads
    x = frames.reshape(B * F, C * H * W) @ params["w_enc"] + params["b_enc"]
    x = x.reshape(B, F, D)
    qkv = jnp.einsum("bfd,ed->bfe", x, params["w_in"]) + params["b_in"]
    q, k, v = qkv[..., :D], qkv[..., D:2 * D], qkv[..., 2 * D:]
    q = q.reshape(B, F, num_heads, dh)
    k = k.reshape(B, F, num_heads, dh)
    v = v.reshape(B, F, num_heads, dh)
    s = jnp.einsum("bqhd,bkhd->bhqk", q, k) / (dh ** 0.5)
    p = jax.nn.softmax(s, axis=-1)
    o = jnp.einsum("bhqk,bkhd->bqhd", p, v).reshape(B, F, D)
    o = jnp.einsum("bfd,ed->bfe", o, params["w_out"]) + params["b_out"]
    vf = o.mean(axis=1)
    return vf @ params["w_fc"].T + params["b_fc"]


if __name__ == "__main__":
    # small shapes consistent with the module's forward pass
    B, F, C, H, W = 2, 8, 3, 16, 16
    D, num_heads, num_classes = 32, 4, 2

    key = jax.random.PRNGKey(0)
    ks = jax.random.split(key, 8)

    frames = jax.random.normal(ks[0], (B, F, C, H, W), dtype=jnp.float32)

    params = {
        "w_enc": 0.02 * jax.random.normal(ks[1], (C * H * W, D), dtype=jnp.float32),
        "b_enc": 0.01 * jax.random.normal(ks[2], (1, D), dtype=jnp.float32),
        "w_in":  0.05 * jax.random.normal(ks[3], (3 * D, D), dtype=jnp.float32),
        "b_in":  0.01 * jax.random.normal(ks[4], (1, 3 * D), dtype=jnp.float32),
        "w_out": 0.05 * jax.random.normal(ks[5], (D, D), dtype=jnp.float32),
        "b_out": 0.01 * jax.random.normal(ks[6], (1, D), dtype=jnp.float32),
        "w_fc":  0.05 * jax.random.normal(ks[7], (num_classes, D), dtype=jnp.float32),
        "b_fc":  jnp.zeros((1, num_classes), dtype=jnp.float32),
    }

    logits = video_clip_classifier(frames, params, num_heads=num_heads)
    logits = jax.block_until_ready(logits)

    ref = reference(frames, params, num_heads=num_heads)
    assert logits.shape == (B, num_classes)
    # bf16 MXU pipeline (f32 accumulators/softmax) -> bf16-appropriate tolerance
    assert jnp.allclose(logits, ref, rtol=5e-2, atol=5e-3), (logits, ref)

    print("KERNEL_OK")
</pallas_src>

<mosaic_0001>
module attributes {stable_mosaic.version = 11 : i64} {
  func.func @_matmul_bias_kernel(%arg0: i32, %arg1: i32, %arg2: i32, %arg3: memref<8x768xbf16, #tpu.memory_space<vmem>>, %arg4: memref<768x128xbf16, #tpu.memory_space<vmem>>, %arg5: memref<1x128xf32, #tpu.memory_space<vmem>>, %arg6: memref<8x128xbf16, #tpu.memory_space<vmem>>, %arg7: memref<8x128xf32, #tpu.memory_space<vmem>>) attributes {dimension_semantics = [#tpu.dimension_semantics<parallel>, #tpu.dimension_semantics<parallel>, #tpu.dimension_semantics<arbitrary>], iteration_bounds = array<i64: 2, 1, 1>, scalar_prefetch = 0 : i64, scratch_operands = 1 : i64, tpu.core_type = #tpu.core_type<tc>, window_params = [{transform_indices = @transform_0, window_bounds = array<i64: 8, 768>}, {transform_indices = @transform_1, window_bounds = array<i64: 768, 128>}, {transform_indices = @transform_2, window_bounds = array<i64: 1, 128>}, {transform_indices = @transform_3, window_bounds = array<i64: 8, 128>}]} {
    %c0_i32 = arith.constant 0 : i32
    %0 = arith.cmpi eq, %arg2, %c0_i32 : i32
    %1 = arith.extui %0 : i1 to i32
    %c0_i32_0 = arith.constant 0 : i32
    %2 = arith.cmpi ne, %1, %c0_i32_0 : i32
    scf.if %2 {
      %cst_10 = arith.constant 0.000000e+00 : f32
      %12 = vector.broadcast %cst_10 : f32 to vector<8x128xf32>
      %c0_11 = arith.constant 0 : index
      %c0_12 = arith.constant 0 : index
      %13 = vector.load %arg7[%c0_11, %c0_12] : memref<8x128xf32, #tpu.memory_space<vmem>>, vector<8x128xf32>
      tpu.vector_store %arg7[%c0_11, %c0_12], %12 {strides = array<i32>} : memref<8x128xf32, #tpu.memory_space<vmem>>, vector<8x128xf32>,
    } else {
    }
    %c0 = arith.constant 0 : index
    %c0_1 = arith.constant 0 : index
    %3 = vector.load %arg7[%c0, %c0_1] : memref<8x128xf32, #tpu.memory_space<vmem>>, vector<8x128xf32>
    %c0_2 = arith.constant 0 : index
    %c0_3 = arith.constant 0 : index
    %4 = vector.load %arg3[%c0_2, %c0_3] : memref<8x768xbf16, #tpu.memory_space<vmem>>, vector<8x768xbf16>
    %c0_4 = arith.constant 0 : index
    %c0_5 = arith.constant 0 : index
    %5 = vector.load %arg4[%c0_4, %c0_5] : memref<768x128xbf16, #tpu.memory_space<vmem>>, vector<768x128xbf16>
    %cst = arith.constant dense<0.000000e+00> : vector<8x128xf32>
    %6 = tpu.matmul %4, %5, %cst {dimension_numbers = #tpu.dot_dimension_numbers<[1], [0], [0], [1], [0, 0, 1, 1], [], []>} : vector<8x768xbf16>, vector<768x128xbf16>, vector<8x128xf32> -> vector<8x128xf32>
    %7 = arith.addf %3, %6 : vector<8x128xf32>
    %c0_6 = arith.constant 0 : index
    %c0_7 = arith.constant 0 : index
    %8 = vector.load %arg7[%c0_6, %c0_7] : memref<8x128xf32, #tpu.memory_space<vmem>>, vector<8x128xf32>
    tpu.vector_store %arg7[%c0_6, %c0_7], %7 {strides = array<i32>} : memref<8x128xf32, #tpu.memory_space<vmem>>, vector<8x128xf32>,
    %c0_i32_8 = arith.constant 0 : i32
    %9 = arith.cmpi eq, %arg2, %c0_i32_8 : i32
    %10 = arith.extui %9 : i1 to i32
    %c0_i32_9 = arith.constant 0 : i32
    %11 = arith.cmpi ne, %10, %c0_i32_9 : i32
    scf.if %11 {
      %c0_10 = arith.constant 0 : index
      %c0_11 = arith.constant 0 : index
      %12 = vector.load %arg7[%c0_10, %c0_11] : memref<8x128xf32, #tpu.memory_space<vmem>>, vector<8x128xf32>
      %c0_12 = arith.constant 0 : index
      %c0_13 = arith.constant 0 : index
      %13 = vector.load %arg5[%c0_12, %c0_13] : memref<1x128xf32, #tpu.memory_space<vmem>>, vector<1x128xf32>
      %14 = vector.broadcast %13 : vector<1x128xf32> to vector<8x128xf32>
      %15 = arith.addf %12, %14 : vector<8x128xf32>
      %16 = arith.truncf %15 : vector<8x128xf32> to vector<8x128xbf16>
      %c0_14 = arith.constant 0 : index
      %c0_15 = arith.constant 0 : index
      %17 = vector.load %arg6[%c0_14, %c0_15] : memref<8x128xbf16, #tpu.memory_space<vmem>>, vector<8x128xbf16>
      tpu.vector_store %arg6[%c0_14, %c0_15], %16 {strides = array<i32>} : memref<8x128xbf16, #tpu.memory_space<vmem>>, vector<8x128xbf16>,
    } else {
    }
    return
  }
  func.func @transform_0(%arg0: i32, %arg1: i32, %arg2: i32) -> (i32, i32) {
    %c0_i32 = arith.constant 0 : i32
    return %arg0, %arg2 : i32, i32
  }
  func.func @transform_1(%arg0: i32, %arg1: i32, %arg2: i32) -> (i32, i32) {
    %c0_i32 = arith.constant 0 : i32
    return %arg2, %arg1 : i32, i32
  }
  func.func @transform_2(%arg0: i32, %arg1: i32, %arg2: i32) -> (i32, i32) {
    %c0_i32 = arith.constant 0 : i32
    %c0_i32_0 = arith.constant 0 : i32
    return %c0_i32, %arg1 : i32, i32
  }
  func.func @transform_3(%arg0: i32, %arg1: i32, %arg2: i32) -> (i32, i32) {
    %c0_i32 = arith.constant 0 : i32
    return %arg0, %arg1 : i32, i32
  }
}

</mosaic_0001>

<llo_original>
// kernel: tpu_custom_call.1
$region0: #{tpu_custom_call.1}
  #allocation0 [shape = 'u32[]', space=smem, size = 0x4, offset = 0x4, fixed_abs, tag = 'smem constant byte address 0x4 - core index']
  #allocation1 [shape = 'u32[144,128]{1,0:T(1,128)}', space=vmem, size = 0x12000, scoped, tag = 'internal scratch']
  #allocation2 [shape = 'f32[8,128]{1,0:T(8,128)}', space=vmem, size = 0x1000, scoped, tag = 'scratch operand']
  %s0 = inlined_call_operand.hbm [shape: bf16[16,768], index: 0, kind: input, shape index: {}]
  %s1 = inlined_call_operand.hbm [shape: bf16[768,128], index: 1, kind: input, shape index: {}]
  %s2 = inlined_call_operand.vmem [shape: f32[1,128], index: 2, kind: input, shape index: {}]
  %s3 = inlined_call_operand.hbm [shape: bf16[16,128], index: 3, kind: output, shape index: {}]
  %s4 = sld [smem:[#allocation0]]
  $region61: #{tpu_custom_call.1} parent=0
    _
  %s6 = ssub.s32 1, %s4
  %s7 = scalar_select 0, %s6, %s4
  $region1: #{tpu_custom_call.1} parent=0
    #allocation3 [shape = 'u8[24576]{0}', space=vmem, size = 0x6000, scoped, tag = 'input window, operand 0']
    #allocation4 [shape = 's32[2]{0}', space=sflag, size = 0x8, scoped, tag = 'scoped memory for tpu_custom_call.1']
    #allocation5 [shape = 's32[2]{0}', space=sflag, size = 0x8, scoped, tag = 'scoped memory for tpu_custom_call.1']
    #allocation6 [shape = 'u8[196608]{0}', space=vmem, size = 0x30000, scoped, tag = 'input window, operand 1, single buffered']
    #allocation7 [shape = 's32[1]{0}', space=sflag, size = 0x4, scoped, tag = 'scoped memory for tpu_custom_call.1']
    #allocation8 [shape = 'u8[4096]{0}', space=vmem, size = 0x1000, scoped, tag = 'output window, operand 0']
    %8 = vsyncpa [#allocation4], 0
    %s9 = scalar_lea.sflag [#allocation4], 1
    %10 = vsyncpa %s9, 0
    %11 = vsyncpa [#allocation7], 0
    %12 = vsyncpa [#allocation5], 0
    %s13 = scalar_lea.sflag [#allocation5], 1
    %14 = vsyncpa %s13, 0
    loop: start=0, step=1, limit=4
    $region2: #{tpu_custom_call.1} parent=1 // loop_pre_header
      _
    $region3: #{tpu_custom_call.1} parent=1 // loop_header
      %s16 = sphi 0, %s20
      %p17 = scmp.ge.s32.totalorder %s16, 4
      %s23 = sphi 0, %s42
      %s24 = sphi 0, %s38
      %s25 = sphi 0, %s34
      %s26 = sphi 0, %s23
      %s27 = sphi 0, %s24
      %s28 = sphi 0, %s25
      %s29 = sphi 0, %s26
      %s30 = sphi 0, %s27
      %s31 = sphi 0, %s28
      %s47 = sphi 0, %s49
      %s50 = sphi 0, %s47
      %s51 = sphi 0, %s50
      %s67 = sphi 0, %s51
      %s75 = sphi 0, %s77
      %s78 = sphi 0, %s75
      %s79 = sphi 0, %s78
      %s95 = sphi 0, %s79
      %s101 = sphi 0, %s103
      %s104 = sphi 0, %s101
      %s105 = sphi 0, %s104
      %s121 = sphi 0, %s105
      %s129 = sphi 0, %s131
      %s132 = sphi 0, %s129
      %s133 = sphi 0, %s132
      %s149 = sphi 0, %s133
    $region4: #{tpu_custom_call.1} parent=1 // loop_header_branch
      %19 = sbr.rel (%p17) target = $region8
    $region5: #{tpu_custom_call.1} parent=1 // loop_body
      %s21 = ssub.s32 %s16, 1
      %s22 = ssub.s32 %s16, 2
      %s32 = sadd.s32 1, %s25
      %p33 = scmp.ge.s32.totalorder %s32, 1
      %s34 = scalar_select %p33, 0, %s32
      %s35 = sadd.s32 1, %s24
      %s36 = scalar_select %p33, %s35, %s24
      %p37 = scmp.ge.s32.totalorder %s36, 1
      %s38 = scalar_select %p37, 0, %s36
      %s39 = sadd.s32 1, %s23
      %s40 = scalar_select %p37, %s39, %s23
      %p41 = scmp.ge.s32.totalorder %s40, 2
      %s42 = scalar_select %p41, 0, %s40
      %s43 = ssub.s32 %s23, %s42
      %s44 = ssub.s32 %s25, %s34
      %s45 = sor.u32 %s43, %s44
      %p46 = scmp.eq.s32.totalorder %s45, 0
      %s48 = sadd.s32 %s47, 1
      %s49 = scalar_select %p46, %s47, %s48
      %p52 = pneg %p46
      %p53 = scmp.eq.s32.totalorder %s16, 1
      %p54 = por %p52, %p53
      %p55 = scmp.ne.s32.totalorder %s47, %s50
      %p56 = scmp.eq.s32.totalorder %s16, 0
      %p57 = por %p55, %p56
      %p58 = scmp.ne.s32.totalorder %s47, %s50
      %p59 = scmp.eq.s32.totalorder %s21, 1
      %p60 = por %p58, %p59
      %p61 = scmp.ne.s32.totalorder %s50, %s51
      %p62 = scmp.eq.s32.totalorder %s21, 0
      %p63 = por %p61, %p62
      %p64 = scmp.ne.s32.totalorder %s50, %s51
      %p65 = scmp.eq.s32.totalorder %s22, 1
      %p66 = por %p64, %p65
      %p68 = scmp.ne.s32.totalorder %s51, %s67
      %p69 = scmp.eq.s32.totalorder %s22, 0
      %p70 = por %p68, %p69
      %s71 = ssub.s32 %s25, %s34
      %s72 = ssub.s32 %s24, %s38
      %s73 = sor.u32 %s71, %s72
      %p74 = scmp.eq.s32.totalorder %s73, 0
      %s76 = sadd.s32 %s75, 1
      %s77 = scalar_select %p74, %s75, %s76
      %p80 = pneg %p74
      %p81 = scmp.eq.s32.totalorder %s16, 1
      %p82 = por %p80, %p81
      %p83 = scmp.ne.s32.totalorder %s75, %s78
      %p84 = scmp.eq.s32.totalorder %s16, 0
      %p85 = por %p83, %p84
      %p86 = scmp.ne.s32.totalorder %s75, %s78
      %p87 = scmp.eq.s32.totalorder %s21, 1
      %p88 = por %p86, %p87
      %p89 = scmp.ne.s32.totalorder %s78, %s79
      %p90 = scmp.eq.s32.totalorder %s21, 0
      %p91 = por %p89, %p90
      %p92 = scmp.ne.s32.totalorder %s78, %s79
      %p93 = scmp.eq.s32.totalorder %s22, 1
      %p94 = por %p92, %p93
      %p96 = scmp.ne.s32.totalorder %s79, %s95
      %p97 = scmp.eq.s32.totalorder %s22, 0
      %p98 = por %p96, %p97
      %s99 = ssub.s32 %s24, %s38
      %p100 = scmp.eq.s32.totalorder %s99, 0
      %s102 = sadd.s32 %s101, 1
      %s103 = scalar_select %p100, %s101, %s102
      %p106 = pneg %p100
      %p107 = scmp.eq.s32.totalorder %s16, 1
      %p108 = por %p106, %p107
      %p109 = scmp.ne.s32.totalorder %s101, %s104
      %p110 = scmp.eq.s32.totalorder %s16, 0
      %p111 = por %p109, %p110
      %p112 = scmp.ne.s32.totalorder %s101, %s104
      %p113 = scmp.eq.s32.totalorder %s21, 1
      %p114 = por %p112, %p113
      %p115 = scmp.ne.s32.totalorder %s104, %s105
      %p116 = scmp.eq.s32.totalorder %s21, 0
      %p117 = por %p115, %p116
      %p118 = scmp.ne.s32.totalorder %s104, %s105
      %p119 = scmp.eq.s32.totalorder %s22, 1
      %p120 = por %p118, %p119
      %p122 = scmp.ne.s32.totalorder %s105, %s121
      %p123 = scmp.eq.s32.totalorder %s22, 0
      %p124 = por %p122, %p123
      %s125 = ssub.s32 %s23, %s42
      %s126 = ssub.s32 %s24, %s38
      %s127 = sor.u32 %s125, %s126
      %p128 = scmp.eq.s32.totalorder %s127, 0
      %s130 = sadd.s32 %s129, 1
      %s131 = scalar_select %p128, %s129, %s130
      %p134 = pneg %p128
      %p135 = scmp.eq.s32.totalorder %s16, 1
      %p136 = por %p134, %p135
      %p137 = scmp.ne.s32.totalorder %s129, %s132
      %p138 = scmp.eq.s32.totalorder %s16, 0
      %p139 = por %p137, %p138
      %p140 = scmp.ne.s32.totalorder %s129, %s132
      %p141 = scmp.eq.s32.totalorder %s21, 1
      %p142 = por %p140, %p141
      %p143 = scmp.ne.s32.totalorder %s132, %s133
      %p144 = scmp.eq.s32.totalorder %s21, 0
      %p145 = por %p143, %p144
      %p146 = scmp.ne.s32.totalorder %s132, %s133
      %p147 = scmp.eq.s32.totalorder %s22, 1
      %p148 = por %p146, %p147
      %p150 = scmp.ne.s32.totalorder %s133, %s149
      %p151 = scmp.eq.s32.totalorder %s22, 0
      %p152 = por %p150, %p151
      %p153 = scmp.le.s32.totalorder 1, %s16
      %p154 = scmp.lt.s32.totalorder %s16, 3
      %p155 = pnand %p153, %p154
      %p156 = pneg %p155
      // Predicated region
      $region9: #{tpu_custom_call.1} parent=5 // pred_check
        _
      $region10: #{tpu_custom_call.1} parent=5 // pred_check_branch
        %158 = sbr.rel (%p155) target = $region12
      $region11: #{tpu_custom_call.1} parent=5 // pred_region
        %s159 = ssub.s32 %s16, 1
        // Predicated region
        $region13: #{tpu_custom_call.1} parent=11 // pred_check
          %p160 = pneg %p91
        $region14: #{tpu_custom_call.1} parent=11 // pred_check_branch
          %162 = sbr.rel (%p160) target = $region16
        $region15: #{tpu_custom_call.1} parent=11 // pred_region
          %s163 = smul.u32 96, %s28
          %s165 = ssub.s32 6144, 6144
          %166 = vsyncadd [#allocation7], %s165
          %s167 = sadd.s32 %s27, %s163
          %s168 = smul.addr %s167, 64
          %s169 = scalar_lea.hbm %s1, %s168
          %s170 = sshll.u32 [#allocation6], 4
          %s171 = int_to_ptr.vmem [resolvable:$true] %s170
          %176 = dma.hbm_to_vmem [thread:$0]  %s169, 6144, %s171, [#allocation7], 64, 64, 4
        $region16: #{tpu_custom_call.1} parent=11 // pred_fallthru
          _
        // Predicated region
        $region17: #{tpu_custom_call.1} parent=11 // pred_check
          %p177 = pneg %p117
        $region18: #{tpu_custom_call.1} parent=11 // pred_check_branch
          %179 = sbr.rel (%p177) target = $region20
        $region19: #{tpu_custom_call.1} parent=11 // pred_region
          %p180 = scmp.lt.s32.totalorder %s27, 0
          %s181 = scalar_select %p180, %s27, 0
          %s182 = scalar_lea.vmem %s2, %s181
        $region20: #{tpu_custom_call.1} parent=11 // pred_fallthru
          _
      $region12: #{tpu_custom_call.1} parent=5 // pred_fallthru
        _
      %p183 = scmp.lt.s32.totalorder %s16, 2
      // Predicated region
      $region21: #{tpu_custom_call.1} parent=5 // pred_check
        %p184 = pneg %p183
      $region22: #{tpu_custom_call.1} parent=5 // pred_check_branch
        %186 = sbr.rel (%p184) target = $region24
      $region23: #{tpu_custom_call.1} parent=5 // pred_region
        // Predicated region
        $region25: #{tpu_custom_call.1} parent=23 // pred_check
          %p187 = pneg %p57
        $region26: #{tpu_custom_call.1} parent=23 // pred_check_branch
          %189 = sbr.rel (%p187) target = $region28
        $region27: #{tpu_custom_call.1} parent=23 // pred_region
          %s190 = sand.u32 %s47, 1
          %s191 = scalar_lea.sflag [#allocation4], %s190
          %s192 = sand.u32 %s47, 1
          %s193 = smul.addr %s192, 24
          %s194 = scalar_lea.vmem [#allocation3], %s193
          %s195 = smul.u32 6, %s25
          %s197 = ssub.s32 384, 384
          %198 = vsyncadd %s191, %s197
          %s199 = smul.addr %s23, 6
          %s200 = sadd.s32 %s195, %s199
          %s201 = smul.addr %s200, 64
          %s202 = scalar_lea.hbm %s0, %s201
          %s204 = sshll.u32 %s194, 4
          %s205 = int_to_ptr.vmem [resolvable:$true] %s204
          %207 = dma.hbm_to_vmem [thread:$0]  %s202, 384, %s205, %s191
        $region28: #{tpu_custom_call.1} parent=23 // pred_fallthru
          _
      $region24: #{tpu_custom_call.1} parent=5 // pred_fallthru
        _
      %p208 = scmp.le.s32.totalorder 1, %s16
      %p209 = scmp.lt.s32.totalorder %s16, 3
      %p210 = pnand %p208, %p209
      %p211 = pneg %p210
      // Predicated region
      $region29: #{tpu_custom_call.1} parent=5 // pred_check
        _
      $region30: #{tpu_custom_call.1} parent=5 // pred_check_branch
        %213 = sbr.rel (%p210) target = $region32
      $region31: #{tpu_custom_call.1} parent=5 // pred_region
        %s214 = ssub.s32 %s16, 1
        %s215 = sand.u32 %s50, 1
        %s216 = scalar_lea.sflag [#allocation4], %s215
        %s217 = sand.u32 %s50, 1
        %s218 = smul.addr %s217, 24
        %s219 = scalar_lea.vmem [#allocation3], %s218
        // Predicated region
        $region33: #{tpu_custom_call.1} parent=31 // pred_check
          %p220 = pneg %p63
        $region34: #{tpu_custom_call.1} parent=31 // pred_check_branch
          %222 = sbr.rel (%p220) target = $region36
        $region35: #{tpu_custom_call.1} parent=31 // pred_region
          %223 = dma.done %s216, 384
        $region36: #{tpu_custom_call.1} parent=31 // pred_fallthru
          _
        // Predicated region
        $region37: #{tpu_custom_call.1} parent=31 // pred_check
          %p224 = pneg %p91
        $region38: #{tpu_custom_call.1} parent=31 // pred_check_branch
          %226 = sbr.rel (%p224) target = $region40
        $region39: #{tpu_custom_call.1} parent=31 // pred_region
          %227 = dma.done [#allocation7], 6144
        $region40: #{tpu_custom_call.1} parent=31 // pred_fallthru
          _
        %s228 = sand.u32 %s50, 1
        %s229 = scalar_lea.sflag [#allocation4], %s228
        %s230 = sand.u32 %s50, 1
        %s231 = smul.addr %s230, 24
        %s232 = scalar_lea.vmem [#allocation3], %s231
        %p233 = pneg %p63
        %p234 = pneg %p60
        %p235 = pneg %p91
        %p236 = pneg %p88
        %p237 = scmp.lt.s32.totalorder %s27, 0
        %s238 = scalar_select %p237, %s27, 0
        %s239 = scalar_lea.vmem %s2, %s238
        %p240 = pneg %p117
        %p241 = pneg %p114
        %p242 = pneg %p145
        %p243 = pneg %p142
        %s244 = sand.u32 %s132, 1
        %s245 = scalar_lea.sflag [#allocation5], %s244
        %s246 = sand.u32 %s132, 1
        %s247 = smul.addr %s246, 4
        %s248 = scalar_lea.vmem [#allocation8], %s247
        %s249 = smul.u32 6, %s28
        %s250 = smul.u32 96, %s28
        %p251 = scmp.lt.s32.totalorder %s27, 0
        %s252 = scalar_select %p251, %s27, 0
        %s253 = scalar_lea.vmem %s2, %s252
        %p255 = scmp.eq.s32.totalorder %s28, 0
        // Predicated region
        $region41: #{tpu_custom_call.1} parent=31 // pred_check
          %p256 = pneg %p255
        $region42: #{tpu_custom_call.1} parent=31 // pred_check_branch
          %258 = sbr.rel (%p256) target = $region44
        $region43: #{tpu_custom_call.1} parent=31 // pred_region
          %259 = vst [vmem:[#allocation2] sm:$0xff] 0.0
        $region44: #{tpu_custom_call.1} parent=31 // pred_fallthru
          _
        %v260 = vld [vmem:[#allocation2] sm:$0xff]
        %v261 = vld [vmem:[%s219] sm:$0xff]
        %v262 = vld [vmem:[%s219 + $0x8] sm:$0xff]
        %v263 = vld [vmem:[%s219 + $0x10] sm:$0xff]
        %v264 = vld [vmem:[#allocation6] sm:$0xf]
        %v265 = vld [vmem:[#allocation6 + $0x4] sm:$0xf]
        %v266 = vld [vmem:[#allocation6 + $0x8] sm:$0xf]
        %v267 = vld [vmem:[#allocation6 + $0xc] sm:$0xf]
        %v268 = vld [vmem:[#allocation6 + $0x10] sm:$0xf]
        %v269 = vld [vmem:[#allocation6 + $0x14] sm:$0xf]
        %v270 = vld [vmem:[#allocation6 + $0x18] sm:$0xf]
        %v271 = vld [vmem:[#allocation6 + $0x1c] sm:$0xf]
        %v272 = vld [vmem:[#allocation6 + $0x20] sm:$0xf]
        %v273 = vld [vmem:[#allocation6 + $0x24] sm:$0xf]
        %v274 = vld [vmem:[#allocation6 + $0x28] sm:$0xf]
        %v275 = vld [vmem:[#allocation6 + $0x2c] sm:$0xf]
        %v276 = vld [vmem:[#allocation6 + $0x30] sm:$0xf]
        %v277 = vld [vmem:[#allocation6 + $0x34] sm:$0xf]
        %v278 = vld [vmem:[#allocation6 + $0x38] sm:$0xf]
        %v279 = vld [vmem:[#allocation6 + $0x3c] sm:$0xf]
        %v280 = vld [vmem:[#allocation6 + $0x40] sm:$0xf]
        %v281 = vld [vmem:[#allocation6 + $0x44] sm:$0xf]
        %v282 = vld [vmem:[#allocation6 + $0x48] sm:$0xf]
        %v283 = vld [vmem:[#allocation6 + $0x4c] sm:$0xf]
        %v284 = vld [vmem:[#allocation6 + $0x50] sm:$0xf]
        %v285 = vld [vmem:[#allocation6 + $0x54] sm:$0xf]
        %v286 = vld [vmem:[#allocation6 + $0x58] sm:$0xf]
        %v287 = vld [vmem:[#allocation6 + $0x5c] sm:$0xf]
        %v288 = vld [vmem:[#allocation6 + $0x60] sm:$0xf]
        %v289 = vld [vmem:[#allocation6 + $0x64] sm:$0xf]
        %v290 = vld [vmem:[#allocation6 + $0x68] sm:$0xf]
        %v291 = vld [vmem:[#allocation6 + $0x6c] sm:$0xf]
        %v292 = vld [vmem:[#allocation6 + $0x70] sm:$0xf]
        %v293 = vld [vmem:[#allocation6 + $0x74] sm:$0xf]
        %v294 = vld [vmem:[#allocation6 + $0x78] sm:$0xf]
        %v295 = vld [vmem:[#allocation6 + $0x7c] sm:$0xf]
        %v296 = vld [vmem:[#allocation6 + $0x80] sm:$0xf]
        %v297 = vld [vmem:[#allocation6 + $0x84] sm:$0xf]
        %v298 = vld [vmem:[#allocation6 + $0x88] sm:$0xf]
        %v299 = vld [vmem:[#allocation6 + $0x8c] sm:$0xf]
        %v300 = vld [vmem:[#allocation6 + $0x90] sm:$0xf]
        %v301 = vld [vmem:[#allocation6 + $0x94] sm:$0xf]
        %v302 = vld [vmem:[#allocation6 + $0x98] sm:$0xf]
        %v303 = vld [vmem:[#allocation6 + $0x9c] sm:$0xf]
        %v304 = vld [vmem:[#allocation6 + $0xa0] sm:$0xf]
        %v305 = vld [vmem:[#allocation6 + $0xa4] sm:$0xf]
        %v306 = vld [vmem:[#allocation6 + $0xa8] sm:$0xf]
        %v307 = vld [vmem:[#allocation6 + $0xac] sm:$0xf]
        %v308 = vld [vmem:[#allocation6 + $0xb0] sm:$0xf]
        %v309 = vld [vmem:[#allocation6 + $0xb4] sm:$0xf]
        %v310 = vld [vmem:[#allocation6 + $0xb8] sm:$0xf]
        %v311 = vld [vmem:[#allocation6 + $0xbc] sm:$0xf]
        %v312 = vld [vmem:[#allocation6 + $0xc0] sm:$0xf]
        %v313 = vld [vmem:[#allocation6 + $0xc4] sm:$0xf]
        %v314 = vld [vmem:[#allocation6 + $0xc8] sm:$0xf]
        %v315 = vld [vmem:[#allocation6 + $0xcc] sm:$0xf]
        %v316 = vld [vmem:[#allocation6 + $0xd0] sm:$0xf]
        %v317 = vld [vmem:[#allocation6 + $0xd4] sm:$0xf]
        %v318 = vld [vmem:[#allocation6 + $0xd8] sm:$0xf]
        %v319 = vld [vmem:[#allocation6 + $0xdc] sm:$0xf]
        %v320 = vld [vmem:[#allocation6 + $0xe0] sm:$0xf]
        %v321 = vld [vmem:[#allocation6 + $0xe4] sm:$0xf]
        %v322 = vld [vmem:[#allocation6 + $0xe8] sm:$0xf]
        %v323 = vld [vmem:[#allocation6 + $0xec] sm:$0xf]
        %v324 = vld [vmem:[#allocation6 + $0xf0] sm:$0xf]
        %v325 = vld [vmem:[#allocation6 + $0xf4] sm:$0xf]
        %v326 = vld [vmem:[#allocation6 + $0xf8] sm:$0xf]
        %v327 = vld [vmem:[#allocation6 + $0xfc] sm:$0xf]
        %v328 = vld [vmem:[#allocation6 + $0x100] sm:$0xf]
        %v329 = vld [vmem:[#allocation6 + $0x104] sm:$0xf]
        %v330 = vld [vmem:[#allocation6 + $0x108] sm:$0xf]
        %v331 = vld [vmem:[#allocation6 + $0x10c] sm:$0xf]
        %v332 = vld [vmem:[#allocation6 + $0x110] sm:$0xf]
        %v333 = vld [vmem:[#allocation6 + $0x114] sm:$0xf]
        %v334 = vld [vmem:[#allocation6 + $0x118] sm:$0xf]
        %v335 = vld [vmem:[#allocation6 + $0x11c] sm:$0xf]
        %v336 = vld [vmem:[#allocation6 + $0x120] sm:$0xf]
        %v337 = vld [vmem:[#allocation6 + $0x124] sm:$0xf]
        %v338 = vld [vmem:[#allocation6 + $0x128] sm:$0xf]
        %v339 = vld [vmem:[#allocation6 + $0x12c] sm:$0xf]
        %v340 = vld [vmem:[#allocation6 + $0x130] sm:$0xf]
        %v341 = vld [vmem:[#allocation6 + $0x134] sm:$0xf]
        %v342 = vld [vmem:[#allocation6 + $0x138] sm:$0xf]
        %v343 = vld [vmem:[#allocation6 + $0x13c] sm:$0xf]
        %v344 = vld [vmem:[#allocation6 + $0x140] sm:$0xf]
        %v345 = vld [vmem:[#allocation6 + $0x144] sm:$0xf]
        %v346 = vld [vmem:[#allocation6 + $0x148] sm:$0xf]
        %v347 = vld [vmem:[#allocation6 + $0x14c] sm:$0xf]
        %v348 = vld [vmem:[#allocation6 + $0x150] sm:$0xf]
        %v349 = vld [vmem:[#allocation6 + $0x154] sm:$0xf]
        %v350 = vld [vmem:[#allocation6 + $0x158] sm:$0xf]
        %v351 = vld [vmem:[#allocation6 + $0x15c] sm:$0xf]
        %v352 = vld [vmem:[#allocation6 + $0x160] sm:$0xf]
        %v353 = vld [vmem:[#allocation6 + $0x164] sm:$0xf]
        %v354 = vld [vmem:[#allocation6 + $0x168] sm:$0xf]
        %v355 = vld [vmem:[#allocation6 + $0x16c] sm:$0xf]
        %v356 = vld [vmem:[#allocation6 + $0x170] sm:$0xf]
        %v357 = vld [vmem:[#allocation6 + $0x174] sm:$0xf]
        %v358 = vld [vmem:[#allocation6 + $0x178] sm:$0xf]
        %v359 = vld [vmem:[#allocation6 + $0x17c] sm:$0xf]
        %v363 = vunpack.c.l.b16 %v261
        %v364 = vunpack.c.h.b16 %v261
        %v365 = vunpack.c.l.b16 %v262
        %v366 = vunpack.c.h.b16 %v262
        %v367 = vunpack.c.l.b16 %v263
        %v368 = vunpack.c.h.b16 %v263
        %v369 = vpack.c.b16 %v363, %v363
        %v370 = vpack.c.b16 %v364, %v364
        %v371 = vpack.c.b16 %v365, %v365
        %v372 = vpack.c.b16 %v366, %v366
        %v373 = vpack.c.b16 %v367, %v367
        %v374 = vpack.c.b16 %v368, %v368
        %v477 = vunpack.c.l.b16 %v264
        %v478 = vunpack.c.l.b16 %v265
        %v479 = vunpack.c.l.b16 %v266
        %v480 = vunpack.c.l.b16 %v267
        %v481 = vunpack.c.l.b16 %v268
        %v482 = vunpack.c.l.b16 %v269
        %v483 = vunpack.c.l.b16 %v270
        %v484 = vunpack.c.l.b16 %v271
        %v485 = vunpack.c.l.b16 %v272
        %v486 = vunpack.c.l.b16 %v273
        %v487 = vunpack.c.l.b16 %v274
        %v488 = vunpack.c.l.b16 %v275
        %v489 = vunpack.c.l.b16 %v276
        %v490 = vunpack.c.l.b16 %v277
        %v491 = vunpack.c.l.b16 %v278
        %v492 = vunpack.c.l.b16 %v279
        %v493 = vunpack.c.l.b16 %v280
        %v494 = vunpack.c.l.b16 %v281
        %v495 = vunpack.c.l.b16 %v282
        %v496 = vunpack.c.l.b16 %v283
        %v497 = vunpack.c.l.b16 %v284
        %v498 = vunpack.c.l.b16 %v285
        %v499 = vunpack.c.l.b16 %v286
        %v500 = vunpack.c.l.b16 %v287
        %v501 = vunpack.c.l.b16 %v288
        %v502 = vunpack.c.l.b16 %v289
        %v503 = vunpack.c.l.b16 %v290
        %v504 = vunpack.c.l.b16 %v291
        %v505 = vunpack.c.l.b16 %v292
        %v506 = vunpack.c.l.b16 %v293
        %v507 = vunpack.c.l.b16 %v294
        %v508 = vunpack.c.l.b16 %v295
        %v509 = vunpack.c.l.b16 %v296
        %v510 = vunpack.c.l.b16 %v297
        %v511 = vunpack.c.l.b16 %v298
        %v512 = vunpack.c.l.b16 %v299
        %v513 = vunpack.c.l.b16 %v300
        %v514 = vunpack.c.l.b16 %v301
        %v515 = vunpack.c.l.b16 %v302
        %v516 = vunpack.c.l.b16 %v303
        %v517 = vunpack.c.l.b16 %v304
        %v518 = vunpack.c.l.b16 %v305
        %v519 = vunpack.c.l.b16 %v306
        %v520 = vunpack.c.l.b16 %v307
        %v521 = vunpack.c.l.b16 %v308
        %v522 = vunpack.c.l.b16 %v309
        %v523 = vunpack.c.l.b16 %v310
        %v524 = vunpack.c.l.b16 %v311
        %v525 = vunpack.c.l.b16 %v312
        %v526 = vunpack.c.l.b16 %v313
        %v527 = vunpack.c.l.b16 %v314
        %v528 = vunpack.c.l.b16 %v315
        %v529 = vunpack.c.l.b16 %v316
        %v530 = vunpack.c.l.b16 %v317
        %v531 = vunpack.c.l.b16 %v318
        %v532 = vunpack.c.l.b16 %v319
        %v533 = vunpack.c.l.b16 %v320
        %v534 = vunpack.c.l.b16 %v321
        %v535 = vunpack.c.l.b16 %v322
        %v536 = vunpack.c.l.b16 %v323
        %v537 = vunpack.c.l.b16 %v324
        %v538 = vunpack.c.l.b16 %v325
        %v539 = vunpack.c.l.b16 %v326
        %v540 = vunpack.c.l.b16 %v327
        %v541 = vunpack.c.l.b16 %v328
        %v542 = vunpack.c.l.b16 %v329
        %v543 = vunpack.c.l.b16 %v330
        %v544 = vunpack.c.l.b16 %v331
        %v545 = vunpack.c.l.b16 %v332
        %v546 = vunpack.c.l.b16 %v333
        %v547 = vunpack.c.l.b16 %v334
        %v548 = vunpack.c.l.b16 %v335
        %v549 = vunpack.c.l.b16 %v336
        %v550 = vunpack.c.l.b16 %v337
        %v551 = vunpack.c.l.b16 %v338
        %v552 = vunpack.c.l.b16 %v339
        %v553 = vunpack.c.l.b16 %v340
        %v554 = vunpack.c.l.b16 %v341
        %v555 = vunpack.c.l.b16 %v342
        %v556 = vunpack.c.l.b16 %v343
        %v557 = vunpack.c.l.b16 %v344
        %v558 = vunpack.c.l.b16 %v345
        %v559 = vunpack.c.l.b16 %v346
        %v560 = vunpack.c.l.b16 %v347
        %v561 = vunpack.c.l.b16 %v348
        %v562 = vunpack.c.l.b16 %v349
        %v563 = vunpack.c.l.b16 %v350
        %v564 = vunpack.c.l.b16 %v351
        %v565 = vunpack.c.l.b16 %v352
        %v566 = vunpack.c.l.b16 %v353
        %v567 = vunpack.c.l.b16 %v354
        %v568 = vunpack.c.l.b16 %v355
        %v569 = vunpack.c.l.b16 %v356
        %v570 = vunpack.c.l.b16 %v357
        %v571 = vunpack.c.l.b16 %v358
        %v572 = vunpack.c.l.b16 %v359
        %v573 = vpack.c.b16 %v478, %v477
        %v574 = vpack.c.b16 %v480, %v479
        %v575 = vpack.c.b16 %v482, %v481
        %v576 = vpack.c.b16 %v484, %v483
        %v577 = vpack.c.b16 %v486, %v485
        %v578 = vpack.c.b16 %v488, %v487
        %v579 = vpack.c.b16 %v490, %v489
        %v580 = vpack.c.b16 %v492, %v491
        %v581 = vpack.c.b16 %v494, %v493
        %v582 = vpack.c.b16 %v496, %v495
        %v583 = vpack.c.b16 %v498, %v497
        %v584 = vpack.c.b16 %v500, %v499
        %v585 = vpack.c.b16 %v502, %v501
        %v586 = vpack.c.b16 %v504, %v503
        %v587 = vpack.c.b16 %v506, %v505
        %v588 = vpack.c.b16 %v508, %v507
        %v589 = vpack.c.b16 %v510, %v509
        %v590 = vpack.c.b16 %v512, %v511
        %v591 = vpack.c.b16 %v514, %v513
        %v592 = vpack.c.b16 %v516, %v515
        %v593 = vpack.c.b16 %v518, %v517
        %v594 = vpack.c.b16 %v520, %v519
        %v595 = vpack.c.b16 %v522, %v521
        %v596 = vpack.c.b16 %v524, %v523
        %v597 = vpack.c.b16 %v526, %v525
        %v598 = vpack.c.b16 %v528, %v527
        %v599 = vpack.c.b16 %v530, %v529
        %v600 = vpack.c.b16 %v532, %v531
        %v601 = vpack.c.b16 %v534, %v533
        %v602 = vpack.c.b16 %v536, %v535
        %v603 = vpack.c.b16 %v538, %v537
        %v604 = vpack.c.b16 %v540, %v539
        %v605 = vpack.c.b16 %v542, %v541
        %v606 = vpack.c.b16 %v544, %v543
        %v607 = vpack.c.b16 %v546, %v545
        %v608 = vpack.c.b16 %v548, %v547
        %v609 = vpack.c.b16 %v550, %v549
        %v610 = vpack.c.b16 %v552, %v551
        %v611 = vpack.c.b16 %v554, %v553
        %v612 = vpack.c.b16 %v556, %v555
        %v613 = vpack.c.b16 %v558, %v557
        %v614 = vpack.c.b16 %v560, %v559
        %v615 = vpack.c.b16 %v562, %v561
        %v616 = vpack.c.b16 %v564, %v563
        %v617 = vpack.c.b16 %v566, %v565
        %v618 = vpack.c.b16 %v568, %v567
        %v619 = vpack.c.b16 %v570, %v569
        %v620 = vpack.c.b16 %v572, %v571
        %669 = vmatprep.subr.bf16.mxu0 0
        %670 = vmatpush1.bf16.msra.mxu0 %v580
        %671 = vmatprep.subr.bf16.mxu0 0
        %672 = vmatpush1.bf16.msra.mxu0 %v579
        %673 = vmatprep.subr.bf16.mxu0 0
        %674 = vmatpush1.bf16.msra.mxu0 %v578
        %675 = vmatprep.subr.bf16.mxu0 0
        %676 = vmatpush1.bf16.msra.mxu0 %v577
        %677 = vmatprep.subr.bf16.mxu0 0
        %678 = vmatpush1.bf16.msra.mxu0 %v576
        %679 = vmatprep.subr.bf16.mxu0 0
        %680 = vmatpush1.bf16.msra.mxu0 %v575
        %681 = vmatprep.subr.bf16.mxu0 0
        %682 = vmatpush1.bf16.msra.mxu0 %v574
        %683 = vmatprep.subr.bf16.mxu0 0
        %684 = vmatpush1.bf16.msra.mxu0 %v573
        %685 = vmatprep.subr.bf16.mxu0 0
        %686 = vmatpush2.bf16.msra.mxu0 %v588
        %687 = vmatprep.subr.bf16.mxu0 0
        %688 = vmatpush2.bf16.msra.mxu0 %v587
        %689 = vmatprep.subr.bf16.mxu0 0
        %690 = vmatpush2.bf16.msra.mxu0 %v586
        %691 = vmatprep.subr.bf16.mxu0 0
        %692 = vmatpush2.bf16.msra.mxu0 %v585
        %693 = vmatprep.subr.bf16.mxu0 0
        %694 = vmatpush2.bf16.msra.mxu0 %v584
        %695 = vmatprep.subr.bf16.mxu0 0
        %696 = vmatpush2.bf16.msra.mxu0 %v583
        %697 = vmatprep.subr.bf16.mxu0 0
        %698 = vmatpush2.bf16.msra.mxu0 %v582
        %699 = vmatprep.subr.bf16.mxu0 0
        %700 = vmatpush2.bf16.msra.mxu0 %v581
        %701 = vmatprep.mubr.bf16.mxu0 %v370
        %702 = vmatmul.mubr.bf16.gmra.mxu0 %v369
        %v703 = vpop.f32.mrf.mxu0
        %v704 = vadd.f32 0.0, %v703
        %v705 = vpop.f32.mrf.mxu0
        %v706 = vpop.f32.mrf.mxu0
        %v707 = vpop.f32.mrf.mxu0
        %708 = vdwg.mxu0
        %709 = vmatprep.subr.bf16.mxu0 0
        %710 = vmatpush1.bf16.msra.mxu0 %v596
        %711 = vmatprep.subr.bf16.mxu0 0
        %712 = vmatpush1.bf16.msra.mxu0 %v595
        %713 = vmatprep.subr.bf16.mxu0 0
        %714 = vmatpush1.bf16.msra.mxu0 %v594
        %715 = vmatprep.subr.bf16.mxu0 0
        %716 = vmatpush1.bf16.msra.mxu0 %v593
        %717 = vmatprep.subr.bf16.mxu0 0
        %718 = vmatpush1.bf16.msra.mxu0 %v592
        %719 = vmatprep.subr.bf16.mxu0 0
        %720 = vmatpush1.bf16.msra.mxu0 %v591
        %721 = vmatprep.subr.bf16.mxu0 0
        %722 = vmatpush1.bf16.msra.mxu0 %v590
        %723 = vmatprep.subr.bf16.mxu0 0
        %724 = vmatpush1.bf16.msra.mxu0 %v589
        %725 = vmatprep.subr.bf16.mxu0 0
        %726 = vmatpush2.bf16.msra.mxu0 %v604
        %727 = vmatprep.subr.bf16.mxu0 0
        %728 = vmatpush2.bf16.msra.mxu0 %v603
        %729 = vmatprep.subr.bf16.mxu0 0
        %730 = vmatpush2.bf16.msra.mxu0 %v602
        %731 = vmatprep.subr.bf16.mxu0 0
        %732 = vmatpush2.bf16.msra.mxu0 %v601
        %733 = vmatprep.subr.bf16.mxu0 0
        %734 = vmatpush2.bf16.msra.mxu0 %v600
        %735 = vmatprep.subr.bf16.mxu0 0
        %736 = vmatpush2.bf16.msra.mxu0 %v599
        %737 = vmatprep.subr.bf16.mxu0 0
        %738 = vmatpush2.bf16.msra.mxu0 %v598
        %739 = vmatprep.subr.bf16.mxu0 0
        %740 = vmatpush2.bf16.msra.mxu0 %v597
        %741 = vmatprep.mubr.bf16.mxu0 %v372
        %742 = vmatmul.mubr.bf16.gmra.mxu0 %v371
        %v743 = vpop.f32.mrf.mxu0
        %v744 = vadd.f32 %v704, %v743
        %v745 = vpop.f32.mrf.mxu0
        %v746 = vpop.f32.mrf.mxu0
        %v747 = vpop.f32.mrf.mxu0
        %748 = vdwg.mxu0
        %749 = vmatprep.subr.bf16.mxu0 0
        %750 = vmatpush1.bf16.msra.mxu0 %v612
        %751 = vmatprep.subr.bf16.mxu0 0
        %752 = vmatpush1.bf16.msra.mxu0 %v611
        %753 = vmatprep.subr.bf16.mxu0 0
        %754 = vmatpush1.bf16.msra.mxu0 %v610
        %755 = vmatprep.subr.bf16.mxu0 0
        %756 = vmatpush1.bf16.msra.mxu0 %v609
        %757 = vmatprep.subr.bf16.mxu0 0
        %758 = vmatpush1.bf16.msra.mxu0 %v608
        %759 = vmatprep.subr.bf16.mxu0 0
        %760 = vmatpush1.bf16.msra.mxu0 %v607
        %761 = vmatprep.subr.bf16.mxu0 0
        %762 = vmatpush1.bf16.msra.mxu0 %v606
        %763 = vmatprep.subr.bf16.mxu0 0
        %764 = vmatpush1.bf16.msra.mxu0 %v605
        %765 = vmatprep.subr.bf16.mxu0 0
        %766 = vmatpush2.bf16.msra.mxu0 %v620
        %767 = vmatprep.subr.bf16.mxu0 0
        %768 = vmatpush2.bf16.msra.mxu0 %v619
        %769 = vmatprep.subr.bf16.mxu0 0
        %770 = vmatpush2.bf16.msra.mxu0 %v618
        %771 = vmatprep.subr.bf16.mxu0 0
        %772 = vmatpush2.bf16.msra.mxu0 %v617
        %773 = vmatprep.subr.bf16.mxu0 0
        %774 = vmatpush2.bf16.msra.mxu0 %v616
        %775 = vmatprep.subr.bf16.mxu0 0
        %776 = vmatpush2.bf16.msra.mxu0 %v615
        %777 = vmatprep.subr.bf16.mxu0 0
        %778 = vmatpush2.bf16.msra.mxu0 %v614
        %779 = vmatprep.subr.bf16.mxu0 0
        %780 = vmatpush2.bf16.msra.mxu0 %v613
        %781 = vmatprep.mubr.bf16.mxu0 %v374
        %782 = vmatmul.mubr.bf16.gmra.mxu0 %v373
        %v783 = vpop.f32.mrf.mxu0
        %v784 = vadd.f32 %v744, %v783
        %v785 = vpop.f32.mrf.mxu0
        %v786 = vpop.f32.mrf.mxu0
        %v787 = vpop.f32.mrf.mxu0
        %788 = vdwg.mxu0
        %v789 = vadd.f32 %v260, %v784
        %790 = vst [vmem:[#allocation2] sm:$0xff] %v789
        // Predicated region
        $region45: #{tpu_custom_call.1} parent=31 // pred_check
          %p791 = pneg %p255
        $region46: #{tpu_custom_call.1} parent=31 // pred_check_branch
          %793 = sbr.rel (%p791) target = $region48
        $region47: #{tpu_custom_call.1} parent=31 // pred_region
          %v794 = vld [vmem:[#allocation2] sm:$0xff]
          %v795 = vld [vmem:[%s253] sm:$0x1]
          %v797 = vlaneseq
          %v798 = vshrl.u32 %v797, 7
          %v799 = vsub.s32 0, %v798
          %v800 = vrot.slane %v795, %v799
          %v802 = vadd.f32 %v794, %v800
          %v803 = vpack.c.bf16 %v802, %v802
          %804 = vst [vmem:[%s248] sm:$0xf] %v803
        $region48: #{tpu_custom_call.1} parent=31 // pred_fallthru
          _
        %s805 = sand.u32 %s132, 1
        %s806 = scalar_lea.sflag [#allocation5], %s805
        %s807 = sand.u32 %s132, 1
        %s808 = smul.addr %s807, 4
        %s809 = scalar_lea.vmem [#allocation8], %s808
        // Predicated region
        $region49: #{tpu_custom_call.1} parent=31 // pred_check
          %p810 = pneg %p142
        $region50: #{tpu_custom_call.1} parent=31 // pred_check_branch
          %812 = sbr.rel (%p810) target = $region52
        $region51: #{tpu_custom_call.1} parent=31 // pred_region
          %s814 = ssub.s32 64, 64
          %815 = vsyncadd %s806, %s814
          %s816 = sadd.s32 %s27, %s26
          %s817 = smul.addr %s816, 64
          %s818 = scalar_lea.hbm %s3, %s817
          %s820 = sshll.u32 %s809, 4
          %s821 = int_to_ptr.vmem [resolvable:$true] %s820
          %823 = dma.vmem_to_hbm [thread:$0]  %s821, 64, %s818, %s806
        $region52: #{tpu_custom_call.1} parent=31 // pred_fallthru
          _
      $region32: #{tpu_custom_call.1} parent=5 // pred_fallthru
        _
      %p824 = scmp.le.s32.totalorder 2, %s16
      // Predicated region
      $region53: #{tpu_custom_call.1} parent=5 // pred_check
        %p825 = pneg %p824
      $region54: #{tpu_custom_call.1} parent=5 // pred_check_branch
        %827 = sbr.rel (%p825) target = $region56
      $region55: #{tpu_custom_call.1} parent=5 // pred_region
        %s828 = ssub.s32 %s16, 2
        // Predicated region
        $region57: #{tpu_custom_call.1} parent=55 // pred_check
          %p829 = pneg %p148
        $region58: #{tpu_custom_call.1} parent=55 // pred_check_branch
          %831 = sbr.rel (%p829) target = $region60
        $region59: #{tpu_custom_call.1} parent=55 // pred_region
          %s832 = sand.u32 %s133, 1
          %s833 = scalar_lea.sflag [#allocation5], %s832
          %s834 = sand.u32 %s133, 1
          %s835 = smul.addr %s834, 4
          %s836 = scalar_lea.vmem [#allocation8], %s835
          %837 = dma.done %s833, 64
        $region60: #{tpu_custom_call.1} parent=55 // pred_fallthru
          _
      $region56: #{tpu_custom_call.1} parent=5 // pred_fallthru
        _
    $region6: #{tpu_custom_call.1} parent=1 // loop_footer
      %s20 = sadd.s32 1, %s16
    $region7: #{tpu_custom_call.1} parent=1 // loop_footer_branch
      %15 = sbr.rel target = $region3
    $region8: #{tpu_custom_call.1} parent=1 // loop_exit
      _
    %838 = vsyncpa [#allocation4], 1
    %s839 = scalar_lea.sflag [#allocation4], 1
    %840 = vsyncpa %s839, 1
    %841 = vsyncpa [#allocation7], 1
    %842 = vsyncpa [#allocation5], 1
    %s843 = scalar_lea.sflag [#allocation5], 1
    %844 = vsyncpa %s843, 1

</llo_original>
